<compile_context>
chip_gen: v5e
topology: v5e:2x2
jax: 0.10.0
libtpu: 0.0.40
codegen_flags: <defaults>
</compile_context>

<pallas_src>
import functools

import jax
import jax.numpy as jnp
from jax import lax
from jax.experimental import pallas as pl
from jax.experimental.pallas import tpu as pltpu


# ---------------------------------------------------------------------------
# Kernel 1: fused Q/K/V projection (one token tile per grid step).
# ---------------------------------------------------------------------------
def _qkv_proj_kernel(x_ref, wq_ref, wk_ref, wv_ref, q_ref, k_ref, v_ref, *, q_scale):
    x = x_ref[0]                                                   # (tm, d_in) bf16
    q = jnp.dot(x, wq_ref[...], preferred_element_type=jnp.float32)
    k = jnp.dot(x, wk_ref[...], preferred_element_type=jnp.float32)
    v = jnp.dot(x, wv_ref[...], preferred_element_type=jnp.float32)
    q_ref[0] = (q * jnp.float32(q_scale)).astype(q_ref.dtype)      # fold 1/sqrt(hd) into Q
    k_ref[0] = k.astype(k_ref.dtype)
    v_ref[0] = v.astype(v_ref.dtype)


# ---------------------------------------------------------------------------
# Kernel 2: causal flash attention (online softmax, batched over heads) with a
# fused per-head output projection + bias in the epilogue.
# ---------------------------------------------------------------------------
def _flash_attn_kernel(q_ref, k_ref, v_ref, wo_ref, bo_ref, o_ref,
                       m_scr, l_scr, acc_scr, *, num_heads, tq, tk):
    qi = pl.program_id(1)
    ki = pl.program_id(2)
    neg_big = jnp.float32(-1e30)            # finite; avoids inf-inf -> NaN

    @pl.when(ki == 0)
    def _init():
        m_scr[...] = jnp.full_like(m_scr, neg_big)
        l_scr[...] = jnp.zeros_like(l_scr)
        acc_scr[...] = jnp.zeros_like(acc_scr)

    def _online_softmax_step(apply_mask):
        q = q_ref[0]                        # (H, tq, hd) bf16, pre-scaled by 1/sqrt(hd)
        k = k_ref[0]                        # (H, tk, hd) bf16
        v = v_ref[0]                        # (H, tk, hd) bf16
        s = jnp.einsum('hqd,hkd->hqk', q, k,
                       preferred_element_type=jnp.float32)         # (H, tq, tk) f32
        if apply_mask:                      # only the diagonal tile needs the mask
            row = qi * tq + lax.broadcasted_iota(jnp.int32, (tq, tk), 0)
            col = ki * tk + lax.broadcasted_iota(jnp.int32, (tq, tk), 1)
            disallowed = col > row          # (tq, tk); broadcasts over heads
            s = jnp.where(disallowed, neg_big, s)
        m_prev = m_scr[...]                 # (H, tq, 1)
        m_new = jnp.maximum(m_prev, jnp.max(s, axis=-1, keepdims=True))
        alpha = jnp.exp(m_prev - m_new)
        p = jnp.exp(s - m_new)              # (H, tq, tk) f32
        if apply_mask:
            p = jnp.where(disallowed, 0.0, p)
        l_scr[...] = alpha * l_scr[...] + jnp.sum(p, axis=-1, keepdims=True)
        acc_scr[...] = alpha * acc_scr[...] + jnp.einsum(
            'hqk,hkd->hqd', p.astype(v.dtype), v,
            preferred_element_type=jnp.float32)
        m_scr[...] = m_new

    @pl.when(ki < qi)                       # fully visible KV tiles: no mask work
    def _off_diag():
        _online_softmax_step(apply_mask=False)

    @pl.when(ki == qi)                      # diagonal tile; ki > qi tiles are skipped
    def _diag():
        _online_softmax_step(apply_mask=True)

    @pl.when(ki == qi)                      # causal row complete -> normalize + out-proj
    def _finalize():
        inv_l = pl.reciprocal(l_scr[...], approx=True)             # (H, tq, 1), EUP slot
        ctx = (acc_scr[...] * inv_l).astype(jnp.bfloat16)          # (H, tq, hd)
        d_pad = o_ref.shape[-1]
        out = jnp.zeros((tq, d_pad), jnp.float32)
        for h in range(num_heads):          # small static head loop; runs once per q tile
            out = out + jnp.dot(ctx[h], wo_ref[h],
                                preferred_element_type=jnp.float32)
        # TODO(synk): nn.Dropout on attn_weights is identity at inference (p=0 here);
        # training-mode dropout would use pltpu.prng_seed / pltpu.prng_random_bits on p.
        o_ref[0] = (out + bo_ref[...]).astype(o_ref.dtype)         # bias added once


def multi_head_attention(x, wq, wk, wv, wo, bo, *, num_heads):
    """x: (B, T, d_in); wq/wk/wv: (d_in, d_out) (pre-transposed from nn.Linear);
    wo: (d_out, d_out); bo: (1, d_out).  Returns (B, T, d_out)."""
    B, T, d_in = x.shape
    d_out = wq.shape[1]
    assert d_out % num_heads == 0, "d_out must be divisible by num_heads"
    head_dim = d_out // num_heads

    cdt = jnp.bfloat16
    x_b = x.astype(cdt)

    # ------------------ kernel 1: fused Q/K/V projection -------------------
    tm = T if T <= 256 else 256
    assert T % tm == 0, "T must be a multiple of the projection tile size"
    qkv_shape = jax.ShapeDtypeStruct((B, T, d_out), cdt)
    q_all, k_all, v_all = pl.pallas_call(
        functools.partial(_qkv_proj_kernel, q_scale=1.0 / float(head_dim) ** 0.5),
        out_shape=(qkv_shape, qkv_shape, qkv_shape),
        grid_spec=pltpu.PrefetchScalarGridSpec(
            num_scalar_prefetch=0,
            grid=(B, T // tm),
            in_specs=[
                pl.BlockSpec((1, tm, d_in), lambda b, t: (b, t, 0)),   # x tile
                pl.BlockSpec((d_in, d_out), lambda b, t: (0, 0)),      # Wq (VMEM-resident)
                pl.BlockSpec((d_in, d_out), lambda b, t: (0, 0)),      # Wk
                pl.BlockSpec((d_in, d_out), lambda b, t: (0, 0)),      # Wv
            ],
            out_specs=[
                pl.BlockSpec((1, tm, d_out), lambda b, t: (b, t, 0)),
                pl.BlockSpec((1, tm, d_out), lambda b, t: (b, t, 0)),
                pl.BlockSpec((1, tm, d_out), lambda b, t: (b, t, 0)),
            ]),
        compiler_params=pltpu.CompilerParams(
            dimension_semantics=("parallel", "parallel")),
    )(x_b, wq.astype(cdt), wk.astype(cdt), wv.astype(cdt))

    # Head split: layout plumbing only (mirrors PyTorch .view().transpose(1, 2)).
    def split_heads(a):
        return jnp.transpose(a.reshape(B, T, num_heads, head_dim), (0, 2, 1, 3))

    q_h, k_h, v_h = split_heads(q_all), split_heads(k_all), split_heads(v_all)

    # -------------- kernel 2: flash attention + output projection ----------
    t = T if T <= 128 else 128                # tq == tk
    assert T % t == 0, "T must be a multiple of the attention tile size"
    nt = T // t
    d_pad = max(128, -(-d_out // 128) * 128)  # lane-dense output width (unmasked stores)
    wo_h = jnp.pad(wo, ((0, 0), (0, d_pad - d_out))).reshape(
        num_heads, head_dim, d_pad).astype(cdt)
    bo_p = jnp.pad(bo, ((0, 0), (0, d_pad - d_out))).astype(jnp.float32)

    kernel = functools.partial(_flash_attn_kernel, num_heads=num_heads, tq=t, tk=t)

    out_pad = pl.pallas_call(
        kernel,
        out_shape=jax.ShapeDtypeStruct((B, T, d_pad), x.dtype),
        grid_spec=pltpu.PrefetchScalarGridSpec(
            num_scalar_prefetch=0,
            grid=(B, nt, nt),
            in_specs=[
                pl.BlockSpec((1, num_heads, t, head_dim),
                             lambda b, q, k: (b, 0, q, 0)),                     # Q
                # KV block index clamped to the diagonal: future (skipped) tiles map to
                # the same block as the previous step, so their DMAs are elided.
                pl.BlockSpec((1, num_heads, t, head_dim),
                             lambda b, q, k: (b, 0, jnp.minimum(k, q), 0)),     # K
                pl.BlockSpec((1, num_heads, t, head_dim),
                             lambda b, q, k: (b, 0, jnp.minimum(k, q), 0)),     # V
                pl.BlockSpec((num_heads, head_dim, d_pad),
                             lambda b, q, k: (0, 0, 0)),                        # Wo
                pl.BlockSpec((1, d_pad), lambda b, q, k: (0, 0)),               # bo
            ],
            out_specs=pl.BlockSpec((1, t, d_pad), lambda b, q, k: (b, q, 0)),
            scratch_shapes=[
                pltpu.VMEM((num_heads, t, 1), jnp.float32),          # running max
                pltpu.VMEM((num_heads, t, 1), jnp.float32),          # running sum
                pltpu.VMEM((num_heads, t, head_dim), jnp.float32),   # ctx accumulator
            ]),
        compiler_params=pltpu.CompilerParams(
            dimension_semantics=("parallel", "parallel", "arbitrary")),
    )(q_h, k_h, v_h, wo_h, bo_p)

    return out_pad[..., :d_out]


def _reference(x, wq, wk, wv, wo, bo, *, num_heads):
    """Plain-JAX f32 reference reproducing the PyTorch forward."""
    B, T, d_in = x.shape
    d_out = wq.shape[1]
    hd = d_out // num_heads
    q = (x @ wq).reshape(B, T, num_heads, hd).transpose(0, 2, 1, 3)
    k = (x @ wk).reshape(B, T, num_heads, hd).transpose(0, 2, 1, 3)
    v = (x @ wv).reshape(B, T, num_heads, hd).transpose(0, 2, 1, 3)
    scores = jnp.einsum('bhqd,bhkd->bhqk', q, k)
    mask = jnp.triu(jnp.ones((T, T), bool), k=1)
    scores = jnp.where(mask, -jnp.inf, scores)
    w = jax.nn.softmax(scores / jnp.sqrt(jnp.float32(hd)), axis=-1)
    ctx = jnp.einsum('bhqk,bhkd->bqhd', w, v).reshape(B, T, d_out)
    return ctx @ wo + bo


if __name__ == "__main__":
    # Small shapes consistent with the module: batch=2, seq=8, d_in=32, d_out=32, heads=4.
    B, T, D_IN, D_OUT, H = 2, 8, 32, 32, 4
    key = jax.random.PRNGKey(0)
    kx, kq, kk, kv, ko, kb = jax.random.split(key, 6)

    x = jax.random.normal(kx, (B, T, D_IN), jnp.float32)
    # Weights stored already transposed: (d_in, d_out) so kernels compute x @ W.
    wq = jax.random.normal(kq, (D_IN, D_OUT), jnp.float32) * 0.1
    wk = jax.random.normal(kk, (D_IN, D_OUT), jnp.float32) * 0.1
    wv = jax.random.normal(kv, (D_IN, D_OUT), jnp.float32) * 0.1
    wo = jax.random.normal(ko, (D_OUT, D_OUT), jnp.float32) * 0.1
    bo = jax.random.normal(kb, (1, D_OUT), jnp.float32) * 0.1

    out = multi_head_attention(x, wq, wk, wv, wo, bo, num_heads=H)
    out = jax.block_until_ready(out)

    ref = _reference(x, wq, wk, wv, wo, bo, num_heads=H)
    assert out.shape == (B, T, D_OUT)
    # bf16 MXU operands (f32 accumulation) -> compare at bf16-appropriate tolerance.
    assert jnp.allclose(out, ref, atol=2e-2, rtol=2e-2), "mismatch vs reference"

    print("KERNEL_OK")
</pallas_src>

<mosaic_0001>
module attributes {stable_mosaic.version = 11 : i64} {
  func.func @_qkv_proj_kernel(%arg0: i32, %arg1: i32, %arg2: memref<1x8x32xbf16, #tpu.memory_space<vmem>>, %arg3: memref<32x32xbf16, #tpu.memory_space<vmem>>, %arg4: memref<32x32xbf16, #tpu.memory_space<vmem>>, %arg5: memref<32x32xbf16, #tpu.memory_space<vmem>>, %arg6: memref<1x8x32xbf16, #tpu.memory_space<vmem>>, %arg7: memref<1x8x32xbf16, #tpu.memory_space<vmem>>, %arg8: memref<1x8x32xbf16, #tpu.memory_space<vmem>>) attributes {dimension_semantics = [#tpu.dimension_semantics<parallel>, #tpu.dimension_semantics<parallel>], iteration_bounds = array<i64: 2, 1>, scalar_prefetch = 0 : i64, scratch_operands = 0 : i64, tpu.core_type = #tpu.core_type<tc>, window_params = [{transform_indices = @transform_0, window_bounds = array<i64: 1, 8, 32>}, {pipeline_mode = #tpu.pipeline_mode<synchronous>, transform_indices = @transform_1, window_bounds = array<i64: 32, 32>}, {pipeline_mode = #tpu.pipeline_mode<synchronous>, transform_indices = @transform_2, window_bounds = array<i64: 32, 32>}, {pipeline_mode = #tpu.pipeline_mode<synchronous>, transform_indices = @transform_3, window_bounds = array<i64: 32, 32>}, {transform_indices = @transform_4, window_bounds = array<i64: 1, 8, 32>}, {transform_indices = @transform_5, window_bounds = array<i64: 1, 8, 32>}, {transform_indices = @transform_6, window_bounds = array<i64: 1, 8, 32>}]} {
    %c0 = arith.constant 0 : index
    %c0_0 = arith.constant 0 : index
    %c0_1 = arith.constant 0 : index
    %0 = vector.load %arg2[%c0, %c0_0, %c0_1] : memref<1x8x32xbf16, #tpu.memory_space<vmem>>, vector<1x8x32xbf16>
    %1 = vector.shape_cast %0 : vector<1x8x32xbf16> to vector<8x32xbf16>
    %c0_2 = arith.constant 0 : index
    %c0_3 = arith.constant 0 : index
    %2 = vector.load %arg3[%c0_2, %c0_3] : memref<32x32xbf16, #tpu.memory_space<vmem>>, vector<32x32xbf16>
    %cst = arith.constant dense<0.000000e+00> : vector<8x32xf32>
    %3 = tpu.matmul %1, %2, %cst {dimension_numbers = #tpu.dot_dimension_numbers<[1], [0], [0], [1], [0, 0, 1, 1], [], []>} : vector<8x32xbf16>, vector<32x32xbf16>, vector<8x32xf32> -> vector<8x32xf32>
    %c0_4 = arith.constant 0 : index
    %c0_5 = arith.constant 0 : index
    %4 = vector.load %arg4[%c0_4, %c0_5] : memref<32x32xbf16, #tpu.memory_space<vmem>>, vector<32x32xbf16>
    %cst_6 = arith.constant dense<0.000000e+00> : vector<8x32xf32>
    %5 = tpu.matmul %1, %4, %cst_6 {dimension_numbers = #tpu.dot_dimension_numbers<[1], [0], [0], [1], [0, 0, 1, 1], [], []>} : vector<8x32xbf16>, vector<32x32xbf16>, vector<8x32xf32> -> vector<8x32xf32>
    %c0_7 = arith.constant 0 : index
    %c0_8 = arith.constant 0 : index
    %6 = vector.load %arg5[%c0_7, %c0_8] : memref<32x32xbf16, #tpu.memory_space<vmem>>, vector<32x32xbf16>
    %cst_9 = arith.constant dense<0.000000e+00> : vector<8x32xf32>
    %7 = tpu.matmul %1, %6, %cst_9 {dimension_numbers = #tpu.dot_dimension_numbers<[1], [0], [0], [1], [0, 0, 1, 1], [], []>} : vector<8x32xbf16>, vector<32x32xbf16>, vector<8x32xf32> -> vector<8x32xf32>
    %cst_10 = arith.constant 0.353553385 : f32
    %8 = vector.broadcast %cst_10 : f32 to vector<8x32xf32>
    %9 = arith.mulf %3, %8 : vector<8x32xf32>
    %10 = arith.truncf %9 : vector<8x32xf32> to vector<8x32xbf16>
    %c0_11 = arith.constant 0 : index
    %c0_12 = arith.constant 0 : index
    %c0_13 = arith.constant 0 : index
    %11 = vector.load %arg6[%c0_11, %c0_12, %c0_13] : memref<1x8x32xbf16, #tpu.memory_space<vmem>>, vector<1x8x32xbf16>
    %12 = vector.shape_cast %11 : vector<1x8x32xbf16> to vector<8x32xbf16>
    %13 = vector.shape_cast %10 : vector<8x32xbf16> to vector<1x8x32xbf16>
    tpu.vector_store %arg6[%c0_11, %c0_12, %c0_13], %13 {strides = array<i32>} : memref<1x8x32xbf16, #tpu.memory_space<vmem>>, vector<1x8x32xbf16>,
    %14 = arith.truncf %5 : vector<8x32xf32> to vector<8x32xbf16>
    %c0_14 = arith.constant 0 : index
    %c0_15 = arith.constant 0 : index
    %c0_16 = arith.constant 0 : index
    %15 = vector.load %arg7[%c0_14, %c0_15, %c0_16] : memref<1x8x32xbf16, #tpu.memory_space<vmem>>, vector<1x8x32xbf16>
    %16 = vector.shape_cast %15 : vector<1x8x32xbf16> to vector<8x32xbf16>
    %17 = vector.shape_cast %14 : vector<8x32xbf16> to vector<1x8x32xbf16>
    tpu.vector_store %arg7[%c0_14, %c0_15, %c0_16], %17 {strides = array<i32>} : memref<1x8x32xbf16, #tpu.memory_space<vmem>>, vector<1x8x32xbf16>,
    %18 = arith.truncf %7 : vector<8x32xf32> to vector<8x32xbf16>
    %c0_17 = arith.constant 0 : index
    %c0_18 = arith.constant 0 : index
    %c0_19 = arith.constant 0 : index
    %19 = vector.load %arg8[%c0_17, %c0_18, %c0_19] : memref<1x8x32xbf16, #tpu.memory_space<vmem>>, vector<1x8x32xbf16>
    %20 = vector.shape_cast %19 : vector<1x8x32xbf16> to vector<8x32xbf16>
    %21 = vector.shape_cast %18 : vector<8x32xbf16> to vector<1x8x32xbf16>
    tpu.vector_store %arg8[%c0_17, %c0_18, %c0_19], %21 {strides = array<i32>} : memref<1x8x32xbf16, #tpu.memory_space<vmem>>, vector<1x8x32xbf16>,
    return
  }
  func.func @transform_0(%arg0: i32, %arg1: i32) -> (i32, i32, i32) {
    %c0_i32 = arith.constant 0 : i32
    %c0_i32_0 = arith.constant 0 : i32
    return %arg0, %arg1, %c0_i32 : i32, i32, i32
  }
  func.func @transform_1(%arg0: i32, %arg1: i32) -> (i32, i32) {
    %c0_i32 = arith.constant 0 : i32
    %c0_i32_0 = arith.constant 0 : i32
    %c0_i32_1 = arith.constant 0 : i32
    return %c0_i32, %c0_i32_0 : i32, i32
  }
  func.func @transform_2(%arg0: i32, %arg1: i32) -> (i32, i32) {
    %c0_i32 = arith.constant 0 : i32
    %c0_i32_0 = arith.constant 0 : i32
    %c0_i32_1 = arith.constant 0 : i32
    return %c0_i32, %c0_i32_0 : i32, i32
  }
  func.func @transform_3(%arg0: i32, %arg1: i32) -> (i32, i32) {
    %c0_i32 = arith.constant 0 : i32
    %c0_i32_0 = arith.constant 0 : i32
    %c0_i32_1 = arith.constant 0 : i32
    return %c0_i32, %c0_i32_0 : i32, i32
  }
  func.func @transform_4(%arg0: i32, %arg1: i32) -> (i32, i32, i32) {
    %c0_i32 = arith.constant 0 : i32
    %c0_i32_0 = arith.constant 0 : i32
    return %arg0, %arg1, %c0_i32 : i32, i32, i32
  }
  func.func @transform_5(%arg0: i32, %arg1: i32) -> (i32, i32, i32) {
    %c0_i32 = arith.constant 0 : i32
    %c0_i32_0 = arith.constant 0 : i32
    return %arg0, %arg1, %c0_i32 : i32, i32, i32
  }
  func.func @transform_6(%arg0: i32, %arg1: i32) -> (i32, i32, i32) {
    %c0_i32 = arith.constant 0 : i32
    %c0_i32_0 = arith.constant 0 : i32
    return %arg0, %arg1, %c0_i32 : i32, i32, i32
  }
}

</mosaic_0001>

<llo_original>
// kernel: tpu_custom_call.1
$region0: #{tpu_custom_call.1}
  #allocation0 [shape = 'u32[]', space=smem, size = 0x4, offset = 0x4, fixed_abs, tag = 'smem constant byte address 0x4 - core index']
  #allocation1 [shape = 'u32[72,128]{1,0:T(1,128)}', space=vmem, size = 0x9000, scoped, tag = 'internal scratch']
  %s0 = inlined_call_operand.hbm [shape: bf16[2,8,32], index: 0, kind: input, shape index: {}]
  %s1 = inlined_call_operand.hbm [shape: bf16[32,32], index: 1, kind: input, shape index: {}]
  %s2 = inlined_call_operand.hbm [shape: bf16[32,32], index: 2, kind: input, shape index: {}]
  %s3 = inlined_call_operand.hbm [shape: bf16[32,32], index: 3, kind: input, shape index: {}]
  %s4 = inlined_call_operand.hbm [shape: bf16[2,8,32], index: 4, kind: output, shape index: {0}]
  %s5 = inlined_call_operand.hbm [shape: bf16[2,8,32], index: 5, kind: output, shape index: {1}]
  %s6 = inlined_call_operand.hbm [shape: bf16[2,8,32], index: 6, kind: output, shape index: {2}]
  %7 = xla_tuple %s4, %s5, %s6
  %s8 = sld [smem:[#allocation0]]
  $region81: #{tpu_custom_call.1} parent=0
    _
  %s10 = ssub.s32 1, %s8
  %s11 = scalar_select 0, %s10, %s8
  $region1: #{tpu_custom_call.1} parent=0
    #allocation2 [shape = 'u8[4096]{0}', space=vmem, size = 0x1000, scoped, tag = 'input window, operand 0']
    #allocation3 [shape = 's32[2]{0}', space=sflag, size = 0x8, scoped, tag = 'scoped memory for tpu_custom_call.1']
    #allocation4 [shape = 's32[2]{0}', space=sflag, size = 0x8, scoped, tag = 'scoped memory for tpu_custom_call.1']
    #allocation5 [shape = 'u8[8192]{0}', space=vmem, size = 0x2000, scoped, tag = 'input window, operand 1, single buffered']
    #allocation6 [shape = 's32[1]{0}', space=sflag, size = 0x4, scoped, tag = 'scoped memory for tpu_custom_call.1']
    #allocation7 [shape = 'u8[8192]{0}', space=vmem, size = 0x2000, scoped, tag = 'input window, operand 2, single buffered']
    #allocation8 [shape = 'u8[8192]{0}', space=vmem, size = 0x2000, scoped, tag = 'input window, operand 3, single buffered']
    #allocation9 [shape = 's32[1]{0}', space=sflag, size = 0x4, scoped, tag = 'scoped memory for tpu_custom_call.1']
    #allocation10 [shape = 'u8[4096]{0}', space=vmem, size = 0x1000, scoped, tag = 'output window, operand 0']
    #allocation11 [shape = 'u8[4096]{0}', space=vmem, size = 0x1000, scoped, tag = 'output window, operand 1']
    #allocation12 [shape = 's32[2]{0}', space=sflag, size = 0x8, scoped, tag = 'scoped memory for tpu_custom_call.1']
    #allocation13 [shape = 'u8[4096]{0}', space=vmem, size = 0x1000, scoped, tag = 'output window, operand 2']
    %12 = vsyncpa [#allocation3], 0
    %s13 = scalar_lea.sflag [#allocation3], 1
    %14 = vsyncpa %s13, 0
    %15 = vsyncpa [#allocation6], 0
    %16 = vsyncpa [#allocation9], 0
    %17 = vsyncpa [#allocation4], 0
    %s18 = scalar_lea.sflag [#allocation4], 1
    %19 = vsyncpa %s18, 0
    %20 = vsyncpa [#allocation12], 0
    %s21 = scalar_lea.sflag [#allocation12], 1
    %22 = vsyncpa %s21, 0
    loop: start=0, step=1, limit=4
    $region2: #{tpu_custom_call.1} parent=1 // loop_pre_header
      _
    $region3: #{tpu_custom_call.1} parent=1 // loop_header
      %s24 = sphi 0, %s28
      %p25 = scmp.ge.s32.totalorder %s24, 4
      %s31 = sphi 0, %s43
      %s32 = sphi 0, %s39
      %s33 = sphi 0, %s31
      %s34 = sphi 0, %s32
      %s35 = sphi 0, %s33
      %s36 = sphi 0, %s34
      %s48 = sphi 0, %s50
      %s51 = sphi 0, %s48
      %s52 = sphi 0, %s51
      %s68 = sphi 0, %s52
      %s72 = sphi 0, %s72
      %s74 = sphi 0, %s72
      %s75 = sphi 0, %s74
      %s89 = sphi 0, %s75
      %s93 = sphi 0, %s93
      %s95 = sphi 0, %s93
      %s96 = sphi 0, %s95
      %s110 = sphi 0, %s96
      %s114 = sphi 0, %s114
      %s116 = sphi 0, %s114
      %s117 = sphi 0, %s116
      %s131 = sphi 0, %s117
      %s139 = sphi 0, %s141
      %s142 = sphi 0, %s139
      %s143 = sphi 0, %s142
      %s159 = sphi 0, %s143
      %s167 = sphi 0, %s169
      %s170 = sphi 0, %s167
      %s171 = sphi 0, %s170
      %s187 = sphi 0, %s171
      %s195 = sphi 0, %s197
      %s198 = sphi 0, %s195
      %s199 = sphi 0, %s198
      %s215 = sphi 0, %s199
    $region4: #{tpu_custom_call.1} parent=1 // loop_header_branch
      %27 = sbr.rel (%p25) target = $region8
    $region5: #{tpu_custom_call.1} parent=1 // loop_body
      %s29 = ssub.s32 %s24, 1
      %s30 = ssub.s32 %s24, 2
      %s37 = sadd.s32 1, %s32
      %p38 = scmp.ge.s32.totalorder %s37, 1
      %s39 = scalar_select %p38, 0, %s37
      %s40 = sadd.s32 1, %s31
      %s41 = scalar_select %p38, %s40, %s31
      %p42 = scmp.ge.s32.totalorder %s41, 2
      %s43 = scalar_select %p42, 0, %s41
      %s44 = ssub.s32 %s31, %s43
      %s45 = ssub.s32 %s32, %s39
      %s46 = sor.u32 %s44, %s45
      %p47 = scmp.eq.s32.totalorder %s46, 0
      %s49 = sadd.s32 %s48, 1
      %s50 = scalar_select %p47, %s48, %s49
      %p53 = pneg %p47
      %p54 = scmp.eq.s32.totalorder %s24, 1
      %p55 = por %p53, %p54
      %p56 = scmp.ne.s32.totalorder %s48, %s51
      %p57 = scmp.eq.s32.totalorder %s24, 0
      %p58 = por %p56, %p57
      %p59 = scmp.ne.s32.totalorder %s48, %s51
      %p60 = scmp.eq.s32.totalorder %s29, 1
      %p61 = por %p59, %p60
      %p62 = scmp.ne.s32.totalorder %s51, %s52
      %p63 = scmp.eq.s32.totalorder %s29, 0
      %p64 = por %p62, %p63
      %p65 = scmp.ne.s32.totalorder %s51, %s52
      %p66 = scmp.eq.s32.totalorder %s30, 1
      %p67 = por %p65, %p66
      %p69 = scmp.ne.s32.totalorder %s52, %s68
      %p70 = scmp.eq.s32.totalorder %s30, 0
      %p71 = por %p69, %p70
      %s73 = sadd.s32 %s72, 1
      %p76 = scmp.eq.s32.totalorder %s24, 1
      %p77 = scmp.ne.s32.totalorder %s72, %s74
      %p78 = scmp.eq.s32.totalorder %s24, 0
      %p79 = por %p77, %p78
      %p80 = scmp.ne.s32.totalorder %s72, %s74
      %p81 = scmp.eq.s32.totalorder %s29, 1
      %p82 = por %p80, %p81
      %p83 = scmp.ne.s32.totalorder %s74, %s75
      %p84 = scmp.eq.s32.totalorder %s29, 0
      %p85 = por %p83, %p84
      %p86 = scmp.ne.s32.totalorder %s74, %s75
      %p87 = scmp.eq.s32.totalorder %s30, 1
      %p88 = por %p86, %p87
      %p90 = scmp.ne.s32.totalorder %s75, %s89
      %p91 = scmp.eq.s32.totalorder %s30, 0
      %p92 = por %p90, %p91
      %s94 = sadd.s32 %s93, 1
      %p97 = scmp.eq.s32.totalorder %s24, 1
      %p98 = scmp.ne.s32.totalorder %s93, %s95
      %p99 = scmp.eq.s32.totalorder %s24, 0
      %p100 = por %p98, %p99
      %p101 = scmp.ne.s32.totalorder %s93, %s95
      %p102 = scmp.eq.s32.totalorder %s29, 1
      %p103 = por %p101, %p102
      %p104 = scmp.ne.s32.totalorder %s95, %s96
      %p105 = scmp.eq.s32.totalorder %s29, 0
      %p106 = por %p104, %p105
      %p107 = scmp.ne.s32.totalorder %s95, %s96
      %p108 = scmp.eq.s32.totalorder %s30, 1
      %p109 = por %p107, %p108
      %p111 = scmp.ne.s32.totalorder %s96, %s110
      %p112 = scmp.eq.s32.totalorder %s30, 0
      %p113 = por %p111, %p112
      %s115 = sadd.s32 %s114, 1
      %p118 = scmp.eq.s32.totalorder %s24, 1
      %p119 = scmp.ne.s32.totalorder %s114, %s116
      %p120 = scmp.eq.s32.totalorder %s24, 0
      %p121 = por %p119, %p120
      %p122 = scmp.ne.s32.totalorder %s114, %s116
      %p123 = scmp.eq.s32.totalorder %s29, 1
      %p124 = por %p122, %p123
      %p125 = scmp.ne.s32.totalorder %s116, %s117
      %p126 = scmp.eq.s32.totalorder %s29, 0
      %p127 = por %p125, %p126
      %p128 = scmp.ne.s32.totalorder %s116, %s117
      %p129 = scmp.eq.s32.totalorder %s30, 1
      %p130 = por %p128, %p129
      %p132 = scmp.ne.s32.totalorder %s117, %s131
      %p133 = scmp.eq.s32.totalorder %s30, 0
      %p134 = por %p132, %p133
      %s135 = ssub.s32 %s31, %s43
      %s136 = ssub.s32 %s32, %s39
      %s137 = sor.u32 %s135, %s136
      %p138 = scmp.eq.s32.totalorder %s137, 0
      %s140 = sadd.s32 %s139, 1
      %s141 = scalar_select %p138, %s139, %s140
      %p144 = pneg %p138
      %p145 = scmp.eq.s32.totalorder %s24, 1
      %p146 = por %p144, %p145
      %p147 = scmp.ne.s32.totalorder %s139, %s142
      %p148 = scmp.eq.s32.totalorder %s24, 0
      %p149 = por %p147, %p148
      %p150 = scmp.ne.s32.totalorder %s139, %s142
      %p151 = scmp.eq.s32.totalorder %s29, 1
      %p152 = por %p150, %p151
      %p153 = scmp.ne.s32.totalorder %s142, %s143
      %p154 = scmp.eq.s32.totalorder %s29, 0
      %p155 = por %p153, %p154
      %p156 = scmp.ne.s32.totalorder %s142, %s143
      %p157 = scmp.eq.s32.totalorder %s30, 1
      %p158 = por %p156, %p157
      %p160 = scmp.ne.s32.totalorder %s143, %s159
      %p161 = scmp.eq.s32.totalorder %s30, 0
      %p162 = por %p160, %p161
      %s163 = ssub.s32 %s31, %s43
      %s164 = ssub.s32 %s32, %s39
      %s165 = sor.u32 %s163, %s164
      %p166 = scmp.eq.s32.totalorder %s165, 0
      %s168 = sadd.s32 %s167, 1
      %s169 = scalar_select %p166, %s167, %s168
      %p172 = pneg %p166
      %p173 = scmp.eq.s32.totalorder %s24, 1
      %p174 = por %p172, %p173
      %p175 = scmp.ne.s32.totalorder %s167, %s170
      %p176 = scmp.eq.s32.totalorder %s24, 0
      %p177 = por %p175, %p176
      %p178 = scmp.ne.s32.totalorder %s167, %s170
      %p179 = scmp.eq.s32.totalorder %s29, 1
      %p180 = por %p178, %p179
      %p181 = scmp.ne.s32.totalorder %s170, %s171
      %p182 = scmp.eq.s32.totalorder %s29, 0
      %p183 = por %p181, %p182
      %p184 = scmp.ne.s32.totalorder %s170, %s171
      %p185 = scmp.eq.s32.totalorder %s30, 1
      %p186 = por %p184, %p185
      %p188 = scmp.ne.s32.totalorder %s171, %s187
      %p189 = scmp.eq.s32.totalorder %s30, 0
      %p190 = por %p188, %p189
      %s191 = ssub.s32 %s31, %s43
      %s192 = ssub.s32 %s32, %s39
      %s193 = sor.u32 %s191, %s192
      %p194 = scmp.eq.s32.totalorder %s193, 0
      %s196 = sadd.s32 %s195, 1
      %s197 = scalar_select %p194, %s195, %s196
      %p200 = pneg %p194
      %p201 = scmp.eq.s32.totalorder %s24, 1
      %p202 = por %p200, %p201
      %p203 = scmp.ne.s32.totalorder %s195, %s198
      %p204 = scmp.eq.s32.totalorder %s24, 0
      %p205 = por %p203, %p204
      %p206 = scmp.ne.s32.totalorder %s195, %s198
      %p207 = scmp.eq.s32.totalorder %s29, 1
      %p208 = por %p206, %p207
      %p209 = scmp.ne.s32.totalorder %s198, %s199
      %p210 = scmp.eq.s32.totalorder %s29, 0
      %p211 = por %p209, %p210
      %p212 = scmp.ne.s32.totalorder %s198, %s199
      %p213 = scmp.eq.s32.totalorder %s30, 1
      %p214 = por %p212, %p213
      %p216 = scmp.ne.s32.totalorder %s199, %s215
      %p217 = scmp.eq.s32.totalorder %s30, 0
      %p218 = por %p216, %p217
      %p219 = scmp.le.s32.totalorder 1, %s24
      %p220 = scmp.lt.s32.totalorder %s24, 3
      %p221 = pnand %p219, %p220
      %p222 = pneg %p221
      // Predicated region
      $region9: #{tpu_custom_call.1} parent=5 // pred_check
        _
      $region10: #{tpu_custom_call.1} parent=5 // pred_check_branch
        %224 = sbr.rel (%p221) target = $region12
      $region11: #{tpu_custom_call.1} parent=5 // pred_region
        %s225 = ssub.s32 %s24, 1
        // Predicated region
        $region13: #{tpu_custom_call.1} parent=11 // pred_check
          %p226 = pneg %p85
        $region14: #{tpu_custom_call.1} parent=11 // pred_check_branch
          %228 = sbr.rel (%p226) target = $region16
        $region15: #{tpu_custom_call.1} parent=11 // pred_region
          %230 = vsyncadd [#allocation6], 0
          %s231 = sshll.u32 %s1, 4
          %s232 = int_to_ptr.hbm [resolvable:$true] %s231
          %s233 = sshll.u32 [#allocation5], 4
          %s234 = int_to_ptr.vmem [resolvable:$true] %s233
          %239 = dma.hbm_to_vmem [thread:$0]  %s232, 256, %s234, [#allocation6], 64, 64, 4
        $region16: #{tpu_custom_call.1} parent=11 // pred_fallthru
          _
        // Predicated region
        $region17: #{tpu_custom_call.1} parent=11 // pred_check
          %p240 = pneg %p106
        $region18: #{tpu_custom_call.1} parent=11 // pred_check_branch
          %242 = sbr.rel (%p240) target = $region20
        $region19: #{tpu_custom_call.1} parent=11 // pred_region
          %244 = vsyncadd [#allocation6], 0
          %s245 = sshll.u32 %s2, 4
          %s246 = int_to_ptr.hbm [resolvable:$true] %s245
          %s247 = sshll.u32 [#allocation7], 4
          %s248 = int_to_ptr.vmem [resolvable:$true] %s247
          %253 = dma.hbm_to_vmem [thread:$0]  %s246, 256, %s248, [#allocation6], 64, 64, 4
        $region20: #{tpu_custom_call.1} parent=11 // pred_fallthru
          _
        // Predicated region
        $region21: #{tpu_custom_call.1} parent=11 // pred_check
          %p254 = pneg %p127
        $region22: #{tpu_custom_call.1} parent=11 // pred_check_branch
          %256 = sbr.rel (%p254) target = $region24
        $region23: #{tpu_custom_call.1} parent=11 // pred_region
          %258 = vsyncadd [#allocation9], 0
          %s259 = sshll.u32 %s3, 4
          %s260 = int_to_ptr.hbm [resolvable:$true] %s259
          %s261 = sshll.u32 [#allocation8], 4
          %s262 = int_to_ptr.vmem [resolvable:$true] %s261
          %267 = dma.hbm_to_vmem [thread:$0]  %s260, 256, %s262, [#allocation9], 64, 64, 4
        $region24: #{tpu_custom_call.1} parent=11 // pred_fallthru
          _
      $region12: #{tpu_custom_call.1} parent=5 // pred_fallthru
        _
      %p268 = scmp.lt.s32.totalorder %s24, 2
      // Predicated region
      $region25: #{tpu_custom_call.1} parent=5 // pred_check
        %p269 = pneg %p268
      $region26: #{tpu_custom_call.1} parent=5 // pred_check_branch
        %271 = sbr.rel (%p269) target = $region28
      $region27: #{tpu_custom_call.1} parent=5 // pred_region
        // Predicated region
        $region29: #{tpu_custom_call.1} parent=27 // pred_check
          %p272 = pneg %p58
        $region30: #{tpu_custom_call.1} parent=27 // pred_check_branch
          %274 = sbr.rel (%p272) target = $region32
        $region31: #{tpu_custom_call.1} parent=27 // pred_region
          %s275 = sand.u32 %s48, 1
          %s276 = scalar_lea.sflag [#allocation3], %s275
          %s277 = sand.u32 %s48, 1
          %s278 = smul.addr %s277, 4
          %s279 = scalar_lea.vmem [#allocation2], %s278
          %281 = vsyncadd %s276, 0
          %s282 = sadd.s32 %s32, %s31
          %s283 = smul.addr %s282, 4
          %s284 = scalar_lea.hbm %s0, %s283
          %s286 = sshll.u32 %s284, 4
          %s287 = int_to_ptr.hbm [resolvable:$true] %s286
          %s288 = sshll.u32 %s279, 4
          %s289 = int_to_ptr.vmem [resolvable:$true] %s288
          %291 = dma.hbm_to_vmem [thread:$0]  %s287, 64, %s289, %s276
        $region32: #{tpu_custom_call.1} parent=27 // pred_fallthru
          _
      $region28: #{tpu_custom_call.1} parent=5 // pred_fallthru
        _
      %p292 = scmp.le.s32.totalorder 1, %s24
      %p293 = scmp.lt.s32.totalorder %s24, 3
      %p294 = pnand %p292, %p293
      %p295 = pneg %p294
      // Predicated region
      $region33: #{tpu_custom_call.1} parent=5 // pred_check
        _
      $region34: #{tpu_custom_call.1} parent=5 // pred_check_branch
        %297 = sbr.rel (%p294) target = $region36
      $region35: #{tpu_custom_call.1} parent=5 // pred_region
        %s298 = ssub.s32 %s24, 1
        %s299 = sand.u32 %s51, 1
        %s300 = scalar_lea.sflag [#allocation3], %s299
        %s301 = sand.u32 %s51, 1
        %s302 = smul.addr %s301, 4
        %s303 = scalar_lea.vmem [#allocation2], %s302
        // Predicated region
        $region37: #{tpu_custom_call.1} parent=35 // pred_check
          %p304 = pneg %p64
        $region38: #{tpu_custom_call.1} parent=35 // pred_check_branch
          %306 = sbr.rel (%p304) target = $region40
        $region39: #{tpu_custom_call.1} parent=35 // pred_region
          %308 = dma.done %s300, 64
        $region40: #{tpu_custom_call.1} parent=35 // pred_fallthru
          _
        // Predicated region
        $region41: #{tpu_custom_call.1} parent=35 // pred_check
          %p309 = pneg %p85
        $region42: #{tpu_custom_call.1} parent=35 // pred_check_branch
          %311 = sbr.rel (%p309) target = $region44
        $region43: #{tpu_custom_call.1} parent=35 // pred_region
          %313 = dma.done [#allocation6], 256
        $region44: #{tpu_custom_call.1} parent=35 // pred_fallthru
          _
        // Predicated region
        $region45: #{tpu_custom_call.1} parent=35 // pred_check
          %p314 = pneg %p106
        $region46: #{tpu_custom_call.1} parent=35 // pred_check_branch
          %316 = sbr.rel (%p314) target = $region48
        $region47: #{tpu_custom_call.1} parent=35 // pred_region
          %318 = dma.done [#allocation6], 256
        $region48: #{tpu_custom_call.1} parent=35 // pred_fallthru
          _
        // Predicated region
        $region49: #{tpu_custom_call.1} parent=35 // pred_check
          %p319 = pneg %p127
        $region50: #{tpu_custom_call.1} parent=35 // pred_check_branch
          %321 = sbr.rel (%p319) target = $region52
        $region51: #{tpu_custom_call.1} parent=35 // pred_region
          %323 = dma.done [#allocation9], 256
        $region52: #{tpu_custom_call.1} parent=35 // pred_fallthru
          _
        %s324 = sand.u32 %s51, 1
        %s325 = scalar_lea.sflag [#allocation3], %s324
        %s326 = sand.u32 %s51, 1
        %s327 = smul.addr %s326, 4
        %s328 = scalar_lea.vmem [#allocation2], %s327
        %p329 = pneg %p64
        %p330 = pneg %p61
        %p331 = pneg %p85
        %p332 = pneg %p82
        %p333 = pneg %p106
        %p334 = pneg %p103
        %p335 = pneg %p127
        %p336 = pneg %p124
        %p337 = pneg %p155
        %p338 = pneg %p152
        %s339 = sand.u32 %s142, 1
        %s340 = scalar_lea.sflag [#allocation4], %s339
        %s341 = sand.u32 %s142, 1
        %s342 = smul.addr %s341, 4
        %s343 = scalar_lea.vmem [#allocation10], %s342
        %p344 = pneg %p183
        %p345 = pneg %p180
        %s346 = sand.u32 %s29, 1
        %s347 = scalar_lea.sflag [#allocation12], %s346
        %s348 = sand.u32 %s170, 1
        %s349 = smul.addr %s348, 4
        %s350 = scalar_lea.vmem [#allocation11], %s349
        %p351 = pneg %p211
        %p352 = pneg %p208
        %s353 = sand.u32 %s29, 1
        %s354 = scalar_lea.sflag [#allocation12], %s353
        %s355 = sand.u32 %s198, 1
        %s356 = smul.addr %s355, 4
        %s357 = scalar_lea.vmem [#allocation13], %s356
        %v359 = vld [vmem:[%s303] sm:$0xf]
        %v360 = vld [vmem:[#allocation5] sm:$0xf]
        %v361 = vld [vmem:[#allocation5 + $0x4] sm:$0xf]
        %v362 = vld [vmem:[#allocation5 + $0x8] sm:$0xf]
        %v363 = vld [vmem:[#allocation5 + $0xc] sm:$0xf]
        %v368 = vunpack.c.l.b16 %v360
        %v369 = vunpack.c.l.b16 %v361
        %v370 = vunpack.c.l.b16 %v362
        %v371 = vunpack.c.l.b16 %v363
        %v372 = vpack.c.b16 %v369, %v368
        %v373 = vpack.c.b16 %v371, %v370
        %vm376 = vcmask 261120
        %v378 = vsel %vm376, %v359, 0
        %380 = vmatpush.bf16.msra.mxu0 0
        %381 = vmatpush.bf16.msra.mxu0 0
        %382 = vmatpush.bf16.msra.mxu0 0
        %383 = vmatpush.bf16.msra.mxu0 0
        %384 = vmatpush.bf16.msra.mxu0 0
        %385 = vmatpush.bf16.msra.mxu0 0
        %386 = vmatpush.bf16.msra.mxu0 %v373
        %387 = vmatpush.bf16.msra.mxu0 %v372
        %388 = vmatmul.bf16.gmra.mxu0 %v378
        %v389 = vpop.f32.mrf.mxu0
        %v390 = vadd.f32 0.0, %v389
        %v391 = vpop.f32.mrf.mxu0
        %392 = vdwg.mxu0
        %v393 = vld [vmem:[#allocation7] sm:$0xf]
        %v394 = vld [vmem:[#allocation7 + $0x4] sm:$0xf]
        %v395 = vld [vmem:[#allocation7 + $0x8] sm:$0xf]
        %v396 = vld [vmem:[#allocation7 + $0xc] sm:$0xf]
        %v401 = vunpack.c.l.b16 %v393
        %v402 = vunpack.c.l.b16 %v394
        %v403 = vunpack.c.l.b16 %v395
        %v404 = vunpack.c.l.b16 %v396
        %v405 = vpack.c.b16 %v402, %v401
        %v406 = vpack.c.b16 %v404, %v403
        %409 = vmatpush.bf16.msra.mxu0 0
        %410 = vmatpush.bf16.msra.mxu0 0
        %411 = vmatpush.bf16.msra.mxu0 0
        %412 = vmatpush.bf16.msra.mxu0 0
        %413 = vmatpush.bf16.msra.mxu0 0
        %414 = vmatpush.bf16.msra.mxu0 0
        %415 = vmatpush.bf16.msra.mxu0 %v406
        %416 = vmatpush.bf16.msra.mxu0 %v405
        %417 = vmatmul.bf16.gmra.mxu0 %v378
        %v418 = vpop.f32.mrf.mxu0
        %v419 = vadd.f32 0.0, %v418
        %v420 = vpop.f32.mrf.mxu0
        %421 = vdwg.mxu0
        %v422 = vld [vmem:[#allocation8] sm:$0xf]
        %v423 = vld [vmem:[#allocation8 + $0x4] sm:$0xf]
        %v424 = vld [vmem:[#allocation8 + $0x8] sm:$0xf]
        %v425 = vld [vmem:[#allocation8 + $0xc] sm:$0xf]
        %v430 = vunpack.c.l.b16 %v422
        %v431 = vunpack.c.l.b16 %v423
        %v432 = vunpack.c.l.b16 %v424
        %v433 = vunpack.c.l.b16 %v425
        %v434 = vpack.c.b16 %v431, %v430
        %v435 = vpack.c.b16 %v433, %v432
        %438 = vmatpush.bf16.msra.mxu0 0
        %439 = vmatpush.bf16.msra.mxu0 0
        %440 = vmatpush.bf16.msra.mxu0 0
        %441 = vmatpush.bf16.msra.mxu0 0
        %442 = vmatpush.bf16.msra.mxu0 0
        %443 = vmatpush.bf16.msra.mxu0 0
        %444 = vmatpush.bf16.msra.mxu0 %v435
        %445 = vmatpush.bf16.msra.mxu0 %v434
        %446 = vmatmul.bf16.gmra.mxu0 %v378
        %v447 = vpop.f32.mrf.mxu0
        %v448 = vadd.f32 0.0, %v447
        %v449 = vpop.f32.mrf.mxu0
        %450 = vdwg.mxu0
        %v451 = vmul.f32 %v390, 0.35355338
        %v452 = vpack.c.bf16 %v451, %v451
        %vm453 = vcmask 257024
        %454 = vst.msk [vmem:[%s343] sm:$0xf] %vm453, %v452
        %v455 = vpack.c.bf16 %v419, %v419
        %456 = vst.msk [vmem:[%s350] sm:$0xf] %vm453, %v455
        %v457 = vpack.c.bf16 %v448, %v448
        %458 = vst.msk [vmem:[%s357] sm:$0xf] %vm453, %v457
        %s459 = sand.u32 %s142, 1
        %s460 = scalar_lea.sflag [#allocation4], %s459
        %s461 = sand.u32 %s142, 1
        %s462 = smul.addr %s461, 4
        %s463 = scalar_lea.vmem [#allocation10], %s462
        %s464 = sand.u32 %s29, 1
        %s465 = scalar_lea.sflag [#allocation12], %s464
        %s466 = sand.u32 %s170, 1
        %s467 = smul.addr %s466, 4
        %s468 = scalar_lea.vmem [#allocation11], %s467
        %s469 = sand.u32 %s29, 1
        %s470 = scalar_lea.sflag [#allocation12], %s469
        %s471 = sand.u32 %s198, 1
        %s472 = smul.addr %s471, 4
        %s473 = scalar_lea.vmem [#allocation13], %s472
        // Predicated region
        $region53: #{tpu_custom_call.1} parent=35 // pred_check
          %p474 = pneg %p152
        $region54: #{tpu_custom_call.1} parent=35 // pred_check_branch
          %476 = sbr.rel (%p474) target = $region56
        $region55: #{tpu_custom_call.1} parent=35 // pred_region
          %478 = vsyncadd %s460, 0
          %s479 = sadd.s32 %s34, %s33
          %s480 = smul.addr %s479, 4
          %s481 = scalar_lea.hbm %s4, %s480
          %s483 = sshll.u32 %s463, 4
          %s484 = int_to_ptr.vmem [resolvable:$true] %s483
          %s485 = sshll.u32 %s481, 4
          %s486 = int_to_ptr.hbm [resolvable:$true] %s485
          %488 = dma.vmem_to_hbm [thread:$0]  %s484, 64, %s486, %s460
        $region56: #{tpu_custom_call.1} parent=35 // pred_fallthru
          _
        // Predicated region
        $region57: #{tpu_custom_call.1} parent=35 // pred_check
          %p489 = pneg %p180
        $region58: #{tpu_custom_call.1} parent=35 // pred_check_branch
          %491 = sbr.rel (%p489) target = $region60
        $region59: #{tpu_custom_call.1} parent=35 // pred_region
          %493 = vsyncadd %s465, 0
          %s494 = sadd.s32 %s34, %s33
          %s495 = smul.addr %s494, 4
          %s496 = scalar_lea.hbm %s5, %s495
          %s498 = sshll.u32 %s468, 4
          %s499 = int_to_ptr.vmem [resolvable:$true] %s498
          %s500 = sshll.u32 %s496, 4
          %s501 = int_to_ptr.hbm [resolvable:$true] %s500
          %503 = dma.vmem_to_hbm [thread:$0]  %s499, 64, %s501, %s465
        $region60: #{tpu_custom_call.1} parent=35 // pred_fallthru
          _
        // Predicated region
        $region61: #{tpu_custom_call.1} parent=35 // pred_check
          %p504 = pneg %p208
        $region62: #{tpu_custom_call.1} parent=35 // pred_check_branch
          %506 = sbr.rel (%p504) target = $region64
        $region63: #{tpu_custom_call.1} parent=35 // pred_region
          %508 = vsyncadd %s470, 0
          %s509 = sadd.s32 %s34, %s33
          %s510 = smul.addr %s509, 4
          %s511 = scalar_lea.hbm %s6, %s510
          %s513 = sshll.u32 %s473, 4
          %s514 = int_to_ptr.vmem [resolvable:$true] %s513
          %s515 = sshll.u32 %s511, 4
          %s516 = int_to_ptr.hbm [resolvable:$true] %s515
          %518 = dma.vmem_to_hbm [thread:$0]  %s514, 64, %s516, %s470
        $region64: #{tpu_custom_call.1} parent=35 // pred_fallthru
          _
      $region36: #{tpu_custom_call.1} parent=5 // pred_fallthru
        _
      %p519 = scmp.le.s32.totalorder 2, %s24
      // Predicated region
      $region65: #{tpu_custom_call.1} parent=5 // pred_check
        %p520 = pneg %p519
      $region66: #{tpu_custom_call.1} parent=5 // pred_check_branch
        %522 = sbr.rel (%p520) target = $region68
      $region67: #{tpu_custom_call.1} parent=5 // pred_region
        %s523 = ssub.s32 %s24, 2
        // Predicated region
        $region69: #{tpu_custom_call.1} parent=67 // pred_check
          %p524 = pneg %p158
        $region70: #{tpu_custom_call.1} parent=67 // pred_check_branch
          %526 = sbr.rel (%p524) target = $region72
        $region71: #{tpu_custom_call.1} parent=67 // pred_region
          %s527 = sand.u32 %s143, 1
          %s528 = scalar_lea.sflag [#allocation4], %s527
          %s529 = sand.u32 %s143, 1
          %s530 = smul.addr %s529, 4
          %s531 = scalar_lea.vmem [#allocation10], %s530
          %533 = dma.done %s528, 64
        $region72: #{tpu_custom_call.1} parent=67 // pred_fallthru
          _
        // Predicated region
        $region73: #{tpu_custom_call.1} parent=67 // pred_check
          %p534 = pneg %p186
        $region74: #{tpu_custom_call.1} parent=67 // pred_check_branch
          %536 = sbr.rel (%p534) target = $region76
        $region75: #{tpu_custom_call.1} parent=67 // pred_region
          %s537 = sand.u32 %s30, 1
          %s538 = scalar_lea.sflag [#allocation12], %s537
          %s539 = sand.u32 %s171, 1
          %s540 = smul.addr %s539, 4
          %s541 = scalar_lea.vmem [#allocation11], %s540
          %543 = dma.done %s538, 64
        $region76: #{tpu_custom_call.1} parent=67 // pred_fallthru
          _
        // Predicated region
        $region77: #{tpu_custom_call.1} parent=67 // pred_check
          %p544 = pneg %p214
        $region78: #{tpu_custom_call.1} parent=67 // pred_check_branch
          %546 = sbr.rel (%p544) target = $region80
        $region79: #{tpu_custom_call.1} parent=67 // pred_region
          %s547 = sand.u32 %s30, 1
          %s548 = scalar_lea.sflag [#allocation12], %s547
          %s549 = sand.u32 %s199, 1
          %s550 = smul.addr %s549, 4
          %s551 = scalar_lea.vmem [#allocation13], %s550
          %553 = dma.done %s548, 64
        $region80: #{tpu_custom_call.1} parent=67 // pred_fallthru
          _
      $region68: #{tpu_custom_call.1} parent=5 // pred_fallthru
        _
    $region6: #{tpu_custom_call.1} parent=1 // loop_footer
      %s28 = sadd.s32 1, %s24
    $region7: #{tpu_custom_call.1} parent=1 // loop_footer_branch
      %23 = sbr.rel target = $region3
    $region8: #{tpu_custom_call.1} parent=1 // loop_exit
      _
    %554 = vsyncpa [#allocation3], 1
    %s555 = scalar_lea.sflag [#allocation3], 1
    %556 = vsyncpa %s555, 1
    %557 = vsyncpa [#allocation6], 1
    %558 = vsyncpa [#allocation9], 1
    %559 = vsyncpa [#allocation4], 1
    %s560 = scalar_lea.sflag [#allocation4], 1
    %561 = vsyncpa %s560, 1
    %562 = vsyncpa [#allocation12], 1
    %s563 = scalar_lea.sflag [#allocation12], 1
    %564 = vsyncpa %s563, 1

</llo_original>
